<compile_context>
chip_gen: v5e
topology: v5e:2x2
jax: 0.10.0
libtpu: 0.0.40
codegen_flags: <defaults>
</compile_context>

<pallas_src>
import functools

import jax
import jax.numpy as jnp
from jax.experimental import pallas as pl
from jax.experimental.pallas import tpu as pltpu


def _moie_kernel(x_ref, w_ref, alpha_ref, b_ref, o_ref, acc_ref, *,
                 steps_per_expert, activation):
    k = pl.program_id(2)
    num_k = pl.num_programs(2)

    # --- k == 0: initialise the f32 accumulator with the gated bias -------
    #     acc = sum_e alpha[:, e] * biases[e, :]   (tiny, VPU broadcast-sum)
    @pl.when(k == 0)
    def _init():
        a = alpha_ref[...]                       # (tm, K)  f32
        b = b_ref[...]                           # (K, tn)  f32
        n_exp = a.shape[1]
        bias = a[:, 0:1] * b[0:1, :]
        for e in range(1, n_exp):
            bias = bias + a[:, e:e + 1] * b[e:e + 1, :]
        acc_ref[...] = bias

    # --- expert index for this reduction step ------------------------------
    if steps_per_expert == 1:
        e_idx = k
    else:
        e_idx = k // steps_per_expert

    # alpha column of expert e (dynamic column extract: select + lane reduce)
    a_tile = alpha_ref[...]                                     # (tm, K) f32
    col_ids = jax.lax.broadcasted_iota(jnp.int32, a_tile.shape, 1)
    a_col = jnp.sum(jnp.where(col_ids == e_idx, a_tile, 0.0),
                    axis=1, keepdims=True)                      # (tm, 1)

    # --- MXU contraction for this expert slice; gate applied post-dot in f32
    partial = jnp.dot(x_ref[...], w_ref[...],
                      preferred_element_type=jnp.float32)       # (tm, tn)
    acc_ref[...] += a_col * partial

    # --- epilogue: ReLU (optional) + cast + lane-dense store ---------------
    @pl.when(k == num_k - 1)
    def _epilogue():
        r = acc_ref[...]
        if activation:
            r = jnp.maximum(r, 0.0)
        o_ref[...] = r.astype(o_ref.dtype)


def _round_up(x, m):
    return (x + m - 1) // m * m


def _pick_tile(dim, candidates):
    for c in candidates:
        if dim >= c and dim % c == 0:
            return c
    return dim


def moie_block(x, weights, biases, alpha, *, activation=True,
               use_bf16_matmul=True):
    """
    x:       (B, in_features)
    weights: (K, in_features, out_features)   stacked expert weights
    biases:  (K, out_features)
    alpha:   (B, K)                            gating coefficients
    returns: (B, out_features)  ==  act(sum_k alpha_k * (x @ W_k + b_k))

    use_bf16_matmul: feed the MXU bf16 operands (f32 accumulation, gating and
    bias kept in f32).  Set False for an exact-f32 matmul path.
    """
    B, in_features = x.shape
    K, in_w, out_features = weights.shape
    assert in_w == in_features
    assert biases.shape == (K, out_features)
    assert alpha.shape == (B, K)

    f32 = jnp.float32
    out_dtype = x.dtype
    mxu_dtype = jnp.bfloat16 if use_bf16_matmul else f32

    # --- alignment / padding -------------------------------------------------
    min_m = 16 if (use_bf16_matmul or x.dtype.itemsize < 4) else 8
    in_pad = _round_up(in_features, 128)
    N_pad = _round_up(out_features, 128)
    if B <= 256:
        tm = _round_up(B, min_m)
        M_pad = tm
    else:
        tm = 256
        M_pad = _round_up(B, tm)

    tn = _pick_tile(N_pad, (512, 256, 128))
    tk = _pick_tile(in_pad, (1024, 512, 256, 128))  # always divides in_pad

    # v7x: make sure at least 2 blocks exist on a "parallel" axis when the
    # problem is big enough, so both TensorCores get work.
    if (M_pad // tm) * (N_pad // tn) == 1 and N_pad >= 512 and N_pad % 256 == 0:
        tn = N_pad // 2

    steps_per_expert = in_pad // tk
    num_k = K * steps_per_expert
    grid = (M_pad // tm, N_pad // tn, num_k)

    # --- pad + cast inputs (x stays un-expanded: only (B, in) bytes) --------
    x_p = x.astype(mxu_dtype)
    if (M_pad, in_pad) != (B, in_features):
        x_p = jnp.pad(x_p, ((0, M_pad - B), (0, in_pad - in_features)))

    alpha_p = alpha.astype(f32)
    if M_pad != B:
        alpha_p = jnp.pad(alpha_p, ((0, M_pad - B), (0, 0)))

    w_p = weights.astype(mxu_dtype)
    if (in_pad, N_pad) != (in_features, out_features):
        w_p = jnp.pad(w_p, ((0, 0),
                            (0, in_pad - in_features),
                            (0, N_pad - out_features)))
    w_flat = w_p.reshape(K * in_pad, N_pad)            # (K*in_pad, N_pad)

    b_p = biases.astype(f32)
    if N_pad != out_features:
        b_p = jnp.pad(b_p, ((0, 0), (0, N_pad - out_features)))

    # --- BlockSpecs ----------------------------------------------------------
    if steps_per_expert == 1:
        x_map = lambda i, j, k: (i, 0)
    else:
        x_map = lambda i, j, k: (i, k % steps_per_expert)

    grid_spec = pltpu.PrefetchScalarGridSpec(
        num_scalar_prefetch=0,
        grid=grid,
        in_specs=[
            pl.BlockSpec((tm, tk), x_map),                       # x tile
            pl.BlockSpec((tk, tn), lambda i, j, k: (k, j)),      # W slice
            pl.BlockSpec((tm, K), lambda i, j, k: (i, 0)),       # alpha rows
            pl.BlockSpec((K, tn), lambda i, j, k: (0, j)),       # biases
        ],
        out_specs=pl.BlockSpec((tm, tn), lambda i, j, k: (i, j)),
        scratch_shapes=[pltpu.VMEM((tm, tn), f32)],              # accumulator
    )

    kernel = functools.partial(_moie_kernel,
                               steps_per_expert=steps_per_expert,
                               activation=activation)

    out_padded = pl.pallas_call(
        kernel,
        out_shape=jax.ShapeDtypeStruct((M_pad, N_pad), out_dtype),
        grid_spec=grid_spec,
        compiler_params=pltpu.CompilerParams(
            dimension_semantics=("parallel", "parallel", "arbitrary"),
            vmem_limit_bytes=32 * 1024 * 1024),
    )(x_p, w_flat, alpha_p, b_p)

    return out_padded[:B, :out_features]


def moie_reference(x, weights, biases, alpha, *, activation=True):
    # Pure-JAX reference matching the PyTorch MoIEBlock.forward exactly.
    hi = jax.lax.Precision.HIGHEST
    z = jnp.einsum("bi,kio->kbo", x, weights, precision=hi) \
        + biases[:, None, :]                                   # (K, B, out)
    combined = jnp.einsum("kbo,bk->bo", z, alpha, precision=hi)
    if activation:
        combined = jnp.maximum(combined, 0.0)
    return combined


if __name__ == "__main__":
    def make_case(key, B, in_f, out_f, K):
        kx, ka, kw, kb = jax.random.split(key, 4)
        x = jax.random.normal(kx, (B, in_f), dtype=jnp.float32)
        alpha = jax.nn.softmax(
            jax.random.normal(ka, (B, K), dtype=jnp.float32), axis=-1)
        bound = 1.0 / (in_f ** 0.5)   # nn.Linear-style init
        weights = jax.random.uniform(kw, (K, in_f, out_f),
                                     minval=-bound, maxval=bound,
                                     dtype=jnp.float32)
        biases = jax.random.uniform(kb, (K, out_f),
                                    minval=-bound, maxval=bound,
                                    dtype=jnp.float32)
        return x, alpha, weights, biases

    k1, k2, k3 = jax.random.split(jax.random.PRNGKey(0), 3)

    # Case 1: module-scale small shapes (B=2, 32->32, K=4), ReLU, exact f32.
    x, alpha, weights, biases = make_case(k1, 2, 32, 32, 4)
    out = jax.block_until_ready(
        moie_block(x, weights, biases, alpha, activation=True,
                   use_bf16_matmul=False))
    ref = moie_reference(x, weights, biases, alpha, activation=True)
    assert out.shape == ref.shape
    assert jnp.allclose(out, ref, atol=1e-3, rtol=1e-3), (
        f"case1 max abs err = {jnp.max(jnp.abs(out - ref))}")

    # Case 2: unaligned dims exercising M/in/out zero-padding, exact f32.
    x, alpha, weights, biases = make_case(k2, 40, 48, 72, 3)
    out = jax.block_until_ready(
        moie_block(x, weights, biases, alpha, activation=True,
                   use_bf16_matmul=False))
    ref = moie_reference(x, weights, biases, alpha, activation=True)
    assert out.shape == ref.shape
    assert jnp.allclose(out, ref, atol=1e-3, rtol=1e-3), (
        f"case2 max abs err = {jnp.max(jnp.abs(out - ref))}")

    # Case 3: larger tiled grid with multiple reduction steps; default
    # bf16 MXU operands (f32 accumulation), activation off.
    x, alpha, weights, biases = make_case(k3, 128, 128, 256, 8)
    out = jax.block_until_ready(
        moie_block(x, weights, biases, alpha, activation=False))
    ref = moie_reference(x, weights, biases, alpha, activation=False)
    assert out.shape == ref.shape
    assert jnp.allclose(out, ref, atol=2e-2, rtol=2e-2), (
        f"case3 max abs err = {jnp.max(jnp.abs(out - ref))}")

    print("KERNEL_OK")
</pallas_src>

<mosaic_0001>
module attributes {stable_mosaic.version = 11 : i64} {
  func.func @_moie_kernel(%arg0: i32, %arg1: i32, %arg2: i32, %arg3: memref<8x128xf32, #tpu.memory_space<vmem>>, %arg4: memref<128x128xf32, #tpu.memory_space<vmem>>, %arg5: memref<8x4xf32, #tpu.memory_space<vmem>>, %arg6: memref<4x128xf32, #tpu.memory_space<vmem>>, %arg7: memref<8x128xf32, #tpu.memory_space<vmem>>, %arg8: memref<8x128xf32, #tpu.memory_space<vmem>>) attributes {dimension_semantics = [#tpu.dimension_semantics<parallel>, #tpu.dimension_semantics<parallel>, #tpu.dimension_semantics<arbitrary>], iteration_bounds = array<i64: 1, 1, 4>, scalar_prefetch = 0 : i64, scratch_operands = 1 : i64, tpu.core_type = #tpu.core_type<tc>, window_params = [{transform_indices = @transform_0, window_bounds = array<i64: 8, 128>}, {transform_indices = @transform_1, window_bounds = array<i64: 128, 128>}, {transform_indices = @transform_2, window_bounds = array<i64: 8, 4>}, {transform_indices = @transform_3, window_bounds = array<i64: 4, 128>}, {transform_indices = @transform_4, window_bounds = array<i64: 8, 128>}]} {
    %c0_i32 = arith.constant 0 : i32
    %0 = arith.cmpi eq, %arg2, %c0_i32 : i32
    %1 = arith.extui %0 : i1 to i32
    %c0_i32_0 = arith.constant 0 : i32
    %2 = arith.cmpi ne, %1, %c0_i32_0 : i32
    scf.if %2 {
      %c0_13 = arith.constant 0 : index
      %c0_14 = arith.constant 0 : index
      %22 = vector.load %arg5[%c0_13, %c0_14] : memref<8x4xf32, #tpu.memory_space<vmem>>, vector<8x4xf32>
      %c0_15 = arith.constant 0 : index
      %c0_16 = arith.constant 0 : index
      %23 = vector.load %arg6[%c0_15, %c0_16] : memref<4x128xf32, #tpu.memory_space<vmem>>, vector<4x128xf32>
      %24 = vector.extract_strided_slice %22 {offsets = [0, 0], sizes = [8, 1], strides = [1, 1]} : vector<8x4xf32> to vector<8x1xf32>
      %25 = vector.extract_strided_slice %23 {offsets = [0, 0], sizes = [1, 128], strides = [1, 1]} : vector<4x128xf32> to vector<1x128xf32>
      %26 = vector.broadcast %24 : vector<8x1xf32> to vector<8x128xf32>
      %27 = vector.broadcast %25 : vector<1x128xf32> to vector<8x128xf32>
      %28 = arith.mulf %26, %27 : vector<8x128xf32>
      %29 = vector.extract_strided_slice %22 {offsets = [0, 1], sizes = [8, 1], strides = [1, 1]} : vector<8x4xf32> to vector<8x1xf32>
      %30 = vector.extract_strided_slice %23 {offsets = [1, 0], sizes = [1, 128], strides = [1, 1]} : vector<4x128xf32> to vector<1x128xf32>
      %31 = vector.broadcast %29 : vector<8x1xf32> to vector<8x128xf32>
      %32 = vector.broadcast %30 : vector<1x128xf32> to vector<8x128xf32>
      %33 = arith.mulf %31, %32 : vector<8x128xf32>
      %34 = arith.addf %28, %33 : vector<8x128xf32>
      %35 = vector.extract_strided_slice %22 {offsets = [0, 2], sizes = [8, 1], strides = [1, 1]} : vector<8x4xf32> to vector<8x1xf32>
      %36 = vector.extract_strided_slice %23 {offsets = [2, 0], sizes = [1, 128], strides = [1, 1]} : vector<4x128xf32> to vector<1x128xf32>
      %37 = vector.broadcast %35 : vector<8x1xf32> to vector<8x128xf32>
      %38 = vector.broadcast %36 : vector<1x128xf32> to vector<8x128xf32>
      %39 = arith.mulf %37, %38 : vector<8x128xf32>
      %40 = arith.addf %34, %39 : vector<8x128xf32>
      %41 = vector.extract_strided_slice %22 {offsets = [0, 3], sizes = [8, 1], strides = [1, 1]} : vector<8x4xf32> to vector<8x1xf32>
      %42 = vector.extract_strided_slice %23 {offsets = [3, 0], sizes = [1, 128], strides = [1, 1]} : vector<4x128xf32> to vector<1x128xf32>
      %43 = vector.broadcast %41 : vector<8x1xf32> to vector<8x128xf32>
      %44 = vector.broadcast %42 : vector<1x128xf32> to vector<8x128xf32>
      %45 = arith.mulf %43, %44 : vector<8x128xf32>
      %46 = arith.addf %40, %45 : vector<8x128xf32>
      %c0_17 = arith.constant 0 : index
      %c0_18 = arith.constant 0 : index
      %47 = vector.load %arg8[%c0_17, %c0_18] : memref<8x128xf32, #tpu.memory_space<vmem>>, vector<8x128xf32>
      tpu.vector_store %arg8[%c0_17, %c0_18], %46 {strides = array<i32>} : memref<8x128xf32, #tpu.memory_space<vmem>>, vector<8x128xf32>,
    } else {
    }
    %c0 = arith.constant 0 : index
    %c0_1 = arith.constant 0 : index
    %3 = vector.load %arg5[%c0, %c0_1] : memref<8x4xf32, #tpu.memory_space<vmem>>, vector<8x4xf32>
    %4 = tpu.iota {dimensions = array<i32: 1>} : vector<8x4xi32>
    %5 = vector.broadcast %arg2 : i32 to vector<8x4xi32>
    %6 = arith.cmpi eq, %4, %5 : vector<8x4xi32>
    %cst = arith.constant 0.000000e+00 : f32
    %7 = vector.broadcast %cst : f32 to vector<8x4xf32>
    %8 = arith.select %6, %3, %7 : vector<8x4xi1>, vector<8x4xf32>
    %cst_2 = arith.constant dense<0.000000e+00> : vector<8xf32>
    %9 = vector.multi_reduction <add>, %8, %cst_2 [1] : vector<8x4xf32> to vector<8xf32>
    %10 = vector.shape_cast %9 : vector<8xf32> to vector<8x1xf32>
    %c0_3 = arith.constant 0 : index
    %c0_4 = arith.constant 0 : index
    %11 = vector.load %arg3[%c0_3, %c0_4] : memref<8x128xf32, #tpu.memory_space<vmem>>, vector<8x128xf32>
    %c0_5 = arith.constant 0 : index
    %c0_6 = arith.constant 0 : index
    %12 = vector.load %arg4[%c0_5, %c0_6] : memref<128x128xf32, #tpu.memory_space<vmem>>, vector<128x128xf32>
    %cst_7 = arith.constant dense<0.000000e+00> : vector<8x128xf32>
    %13 = tpu.matmul %11, %12, %cst_7 {dimension_numbers = #tpu.dot_dimension_numbers<[1], [0], [0], [1], [0, 0, 1, 1], [], []>} : vector<8x128xf32>, vector<128x128xf32>, vector<8x128xf32> -> vector<8x128xf32>
    %c0_8 = arith.constant 0 : index
    %c0_9 = arith.constant 0 : index
    %14 = vector.load %arg8[%c0_8, %c0_9] : memref<8x128xf32, #tpu.memory_space<vmem>>, vector<8x128xf32>
    %15 = vector.broadcast %10 : vector<8x1xf32> to vector<8x128xf32>
    %16 = arith.mulf %15, %13 : vector<8x128xf32>
    %17 = arith.addf %14, %16 : vector<8x128xf32>
    %c0_10 = arith.constant 0 : index
    %c0_11 = arith.constant 0 : index
    %18 = vector.load %arg8[%c0_10, %c0_11] : memref<8x128xf32, #tpu.memory_space<vmem>>, vector<8x128xf32>
    tpu.vector_store %arg8[%c0_10, %c0_11], %17 {strides = array<i32>} : memref<8x128xf32, #tpu.memory_space<vmem>>, vector<8x128xf32>,
    %c3_i32 = arith.constant 3 : i32
    %19 = arith.cmpi eq, %arg2, %c3_i32 : i32
    %20 = arith.extui %19 : i1 to i32
    %c0_i32_12 = arith.constant 0 : i32
    %21 = arith.cmpi ne, %20, %c0_i32_12 : i32
    scf.if %21 {
      %c0_13 = arith.constant 0 : index
      %c0_14 = arith.constant 0 : index
      %22 = vector.load %arg8[%c0_13, %c0_14] : memref<8x128xf32, #tpu.memory_space<vmem>>, vector<8x128xf32>
      %cst_15 = arith.constant 0.000000e+00 : f32
      %23 = vector.broadcast %cst_15 : f32 to vector<8x128xf32>
      %24 = arith.maximumf %22, %23 : vector<8x128xf32>
      %c0_16 = arith.constant 0 : index
      %c0_17 = arith.constant 0 : index
      %25 = vector.load %arg7[%c0_16, %c0_17] : memref<8x128xf32, #tpu.memory_space<vmem>>, vector<8x128xf32>
      tpu.vector_store %arg7[%c0_16, %c0_17], %24 {strides = array<i32>} : memref<8x128xf32, #tpu.memory_space<vmem>>, vector<8x128xf32>,
    } else {
    }
    return
  }
  func.func @transform_0(%arg0: i32, %arg1: i32, %arg2: i32) -> (i32, i32) {
    %c0_i32 = arith.constant 0 : i32
    %c0_i32_0 = arith.constant 0 : i32
    return %arg0, %c0_i32 : i32, i32
  }
  func.func @transform_1(%arg0: i32, %arg1: i32, %arg2: i32) -> (i32, i32) {
    %c0_i32 = arith.constant 0 : i32
    return %arg2, %arg1 : i32, i32
  }
  func.func @transform_2(%arg0: i32, %arg1: i32, %arg2: i32) -> (i32, i32) {
    %c0_i32 = arith.constant 0 : i32
    %c0_i32_0 = arith.constant 0 : i32
    return %arg0, %c0_i32 : i32, i32
  }
  func.func @transform_3(%arg0: i32, %arg1: i32, %arg2: i32) -> (i32, i32) {
    %c0_i32 = arith.constant 0 : i32
    %c0_i32_0 = arith.constant 0 : i32
    return %c0_i32, %arg1 : i32, i32
  }
  func.func @transform_4(%arg0: i32, %arg1: i32, %arg2: i32) -> (i32, i32) {
    %c0_i32 = arith.constant 0 : i32
    return %arg0, %arg1 : i32, i32
  }
}

</mosaic_0001>

<llo_original>
// kernel: tpu_custom_call.1
$region0: #{tpu_custom_call.1}
  #allocation0 [shape = 'u32[]', space=smem, size = 0x4, offset = 0x4, fixed_abs, tag = 'smem constant byte address 0x4 - core index']
  #allocation1 [shape = 'u32[72,128]{1,0:T(1,128)}', space=vmem, size = 0x9000, scoped, tag = 'internal scratch']
  #allocation2 [shape = 'f32[8,128]{1,0:T(8,128)}', space=vmem, size = 0x1000, scoped, tag = 'scratch operand']
  %s0 = inlined_call_operand.vmem [shape: f32[8,128], index: 0, kind: input, shape index: {}]
  %s1 = inlined_call_operand.hbm [shape: f32[512,128], index: 1, kind: input, shape index: {}]
  %s2 = inlined_call_operand.vmem [shape: f32[8,4], index: 2, kind: input, shape index: {}]
  %s3 = inlined_call_operand.vmem [shape: f32[4,128], index: 3, kind: input, shape index: {}]
  %s4 = inlined_call_operand.hbm [shape: f32[8,128], index: 4, kind: output, shape index: {}]
  %s5 = sld [smem:[#allocation0]]
  $region61: #{tpu_custom_call.1} parent=0
    _
  %s7 = ssub.s32 1, %s5
  %s8 = scalar_select 0, %s7, %s5
  $region1: #{tpu_custom_call.1} parent=0
    #allocation3 [shape = 'u8[131072]{0}', space=vmem, size = 0x20000, scoped, tag = 'input window, operand 1']
    #allocation4 [shape = 's32[2]{0}', space=sflag, size = 0x8, scoped, tag = 'scoped memory for tpu_custom_call.1']
    #allocation5 [shape = 's32[2]{0}', space=sflag, size = 0x8, scoped, tag = 'scoped memory for tpu_custom_call.1']
    #allocation6 [shape = 'u8[4096]{0}', space=vmem, size = 0x1000, scoped, tag = 'output window, operand 0, single buffered']
    %9 = vsyncpa [#allocation4], 0
    %s10 = scalar_lea.sflag [#allocation4], 1
    %11 = vsyncpa %s10, 0
    %12 = vsyncpa [#allocation5], 0
    loop: start=0, step=1, limit=6
    $region2: #{tpu_custom_call.1} parent=1 // loop_pre_header
      _
    $region3: #{tpu_custom_call.1} parent=1 // loop_header
      %s14 = sphi 0, %s18
      %p15 = scmp.ge.s32.totalorder %s14, 6
      %s21 = sphi 0, %s40
      %s22 = sphi 0, %s36
      %s23 = sphi 0, %s32
      %s24 = sphi 0, %s21
      %s25 = sphi 0, %s22
      %s26 = sphi 0, %s23
      %s27 = sphi 0, %s24
      %s28 = sphi 0, %s25
      %s29 = sphi 0, %s26
      %s43 = sphi 0, %s45
      %s46 = sphi 0, %s43
      %s47 = sphi 0, %s46
      %s63 = sphi 0, %s47
      %s71 = sphi 0, %s73
      %s74 = sphi 0, %s71
      %s75 = sphi 0, %s74
      %s91 = sphi 0, %s75
      %s97 = sphi 0, %s99
      %s100 = sphi 0, %s97
      %s101 = sphi 0, %s100
      %s117 = sphi 0, %s101
      %s123 = sphi 0, %s125
      %s126 = sphi 0, %s123
      %s127 = sphi 0, %s126
      %s143 = sphi 0, %s127
      %s151 = sphi 0, %s153
      %s154 = sphi 0, %s151
      %s155 = sphi 0, %s154
      %s171 = sphi 0, %s155
    $region4: #{tpu_custom_call.1} parent=1 // loop_header_branch
      %17 = sbr.rel (%p15) target = $region8
    $region5: #{tpu_custom_call.1} parent=1 // loop_body
      %s19 = ssub.s32 %s14, 1
      %s20 = ssub.s32 %s14, 2
      %s30 = sadd.s32 1, %s23
      %p31 = scmp.ge.s32.totalorder %s30, 4
      %s32 = scalar_select %p31, 0, %s30
      %s33 = sadd.s32 1, %s22
      %s34 = scalar_select %p31, %s33, %s22
      %p35 = scmp.ge.s32.totalorder %s34, 1
      %s36 = scalar_select %p35, 0, %s34
      %s37 = sadd.s32 1, %s21
      %s38 = scalar_select %p35, %s37, %s21
      %p39 = scmp.ge.s32.totalorder %s38, 1
      %s40 = scalar_select %p39, 0, %s38
      %s41 = ssub.s32 %s21, %s40
      %p42 = scmp.eq.s32.totalorder %s41, 0
      %s44 = sadd.s32 %s43, 1
      %s45 = scalar_select %p42, %s43, %s44
      %p48 = pneg %p42
      %p49 = scmp.eq.s32.totalorder %s14, 3
      %p50 = por %p48, %p49
      %p51 = scmp.ne.s32.totalorder %s43, %s46
      %p52 = scmp.eq.s32.totalorder %s14, 0
      %p53 = por %p51, %p52
      %p54 = scmp.ne.s32.totalorder %s43, %s46
      %p55 = scmp.eq.s32.totalorder %s19, 3
      %p56 = por %p54, %p55
      %p57 = scmp.ne.s32.totalorder %s46, %s47
      %p58 = scmp.eq.s32.totalorder %s19, 0
      %p59 = por %p57, %p58
      %p60 = scmp.ne.s32.totalorder %s46, %s47
      %p61 = scmp.eq.s32.totalorder %s20, 3
      %p62 = por %p60, %p61
      %p64 = scmp.ne.s32.totalorder %s47, %s63
      %p65 = scmp.eq.s32.totalorder %s20, 0
      %p66 = por %p64, %p65
      %s67 = ssub.s32 %s23, %s32
      %s68 = ssub.s32 %s22, %s36
      %s69 = sor.u32 %s67, %s68
      %p70 = scmp.eq.s32.totalorder %s69, 0
      %s72 = sadd.s32 %s71, 1
      %s73 = scalar_select %p70, %s71, %s72
      %p76 = pneg %p70
      %p77 = scmp.eq.s32.totalorder %s14, 3
      %p78 = por %p76, %p77
      %p79 = scmp.ne.s32.totalorder %s71, %s74
      %p80 = scmp.eq.s32.totalorder %s14, 0
      %p81 = por %p79, %p80
      %p82 = scmp.ne.s32.totalorder %s71, %s74
      %p83 = scmp.eq.s32.totalorder %s19, 3
      %p84 = por %p82, %p83
      %p85 = scmp.ne.s32.totalorder %s74, %s75
      %p86 = scmp.eq.s32.totalorder %s19, 0
      %p87 = por %p85, %p86
      %p88 = scmp.ne.s32.totalorder %s74, %s75
      %p89 = scmp.eq.s32.totalorder %s20, 3
      %p90 = por %p88, %p89
      %p92 = scmp.ne.s32.totalorder %s75, %s91
      %p93 = scmp.eq.s32.totalorder %s20, 0
      %p94 = por %p92, %p93
      %s95 = ssub.s32 %s21, %s40
      %p96 = scmp.eq.s32.totalorder %s95, 0
      %s98 = sadd.s32 %s97, 1
      %s99 = scalar_select %p96, %s97, %s98
      %p102 = pneg %p96
      %p103 = scmp.eq.s32.totalorder %s14, 3
      %p104 = por %p102, %p103
      %p105 = scmp.ne.s32.totalorder %s97, %s100
      %p106 = scmp.eq.s32.totalorder %s14, 0
      %p107 = por %p105, %p106
      %p108 = scmp.ne.s32.totalorder %s97, %s100
      %p109 = scmp.eq.s32.totalorder %s19, 3
      %p110 = por %p108, %p109
      %p111 = scmp.ne.s32.totalorder %s100, %s101
      %p112 = scmp.eq.s32.totalorder %s19, 0
      %p113 = por %p111, %p112
      %p114 = scmp.ne.s32.totalorder %s100, %s101
      %p115 = scmp.eq.s32.totalorder %s20, 3
      %p116 = por %p114, %p115
      %p118 = scmp.ne.s32.totalorder %s101, %s117
      %p119 = scmp.eq.s32.totalorder %s20, 0
      %p120 = por %p118, %p119
      %s121 = ssub.s32 %s22, %s36
      %p122 = scmp.eq.s32.totalorder %s121, 0
      %s124 = sadd.s32 %s123, 1
      %s125 = scalar_select %p122, %s123, %s124
      %p128 = pneg %p122
      %p129 = scmp.eq.s32.totalorder %s14, 3
      %p130 = por %p128, %p129
      %p131 = scmp.ne.s32.totalorder %s123, %s126
      %p132 = scmp.eq.s32.totalorder %s14, 0
      %p133 = por %p131, %p132
      %p134 = scmp.ne.s32.totalorder %s123, %s126
      %p135 = scmp.eq.s32.totalorder %s19, 3
      %p136 = por %p134, %p135
      %p137 = scmp.ne.s32.totalorder %s126, %s127
      %p138 = scmp.eq.s32.totalorder %s19, 0
      %p139 = por %p137, %p138
      %p140 = scmp.ne.s32.totalorder %s126, %s127
      %p141 = scmp.eq.s32.totalorder %s20, 3
      %p142 = por %p140, %p141
      %p144 = scmp.ne.s32.totalorder %s127, %s143
      %p145 = scmp.eq.s32.totalorder %s20, 0
      %p146 = por %p144, %p145
      %s147 = ssub.s32 %s21, %s40
      %s148 = ssub.s32 %s22, %s36
      %s149 = sor.u32 %s147, %s148
      %p150 = scmp.eq.s32.totalorder %s149, 0
      %s152 = sadd.s32 %s151, 1
      %s153 = scalar_select %p150, %s151, %s152
      %p156 = pneg %p150
      %p157 = scmp.eq.s32.totalorder %s14, 3
      %p158 = por %p156, %p157
      %p159 = scmp.ne.s32.totalorder %s151, %s154
      %p160 = scmp.eq.s32.totalorder %s14, 0
      %p161 = por %p159, %p160
      %p162 = scmp.ne.s32.totalorder %s151, %s154
      %p163 = scmp.eq.s32.totalorder %s19, 3
      %p164 = por %p162, %p163
      %p165 = scmp.ne.s32.totalorder %s154, %s155
      %p166 = scmp.eq.s32.totalorder %s19, 0
      %p167 = por %p165, %p166
      %p168 = scmp.ne.s32.totalorder %s154, %s155
      %p169 = scmp.eq.s32.totalorder %s20, 3
      %p170 = por %p168, %p169
      %p172 = scmp.ne.s32.totalorder %s155, %s171
      %p173 = scmp.eq.s32.totalorder %s20, 0
      %p174 = por %p172, %p173
      %p175 = scmp.le.s32.totalorder 1, %s14
      %p176 = scmp.lt.s32.totalorder %s14, 5
      %p177 = pnand %p175, %p176
      %p178 = pneg %p177
      // Predicated region
      $region9: #{tpu_custom_call.1} parent=5 // pred_check
        _
      $region10: #{tpu_custom_call.1} parent=5 // pred_check_branch
        %180 = sbr.rel (%p177) target = $region12
      $region11: #{tpu_custom_call.1} parent=5 // pred_region
        %s181 = ssub.s32 %s14, 1
        // Predicated region
        $region13: #{tpu_custom_call.1} parent=11 // pred_check
          %p182 = pneg %p59
        $region14: #{tpu_custom_call.1} parent=11 // pred_check_branch
          %184 = sbr.rel (%p182) target = $region16
        $region15: #{tpu_custom_call.1} parent=11 // pred_region
          %p185 = scmp.lt.s32.totalorder %s24, 0
          %s186 = scalar_select %p185, %s24, 0
          %s187 = smul.addr %s186, 8
          %s188 = scalar_lea.vmem %s0, %s187
        $region16: #{tpu_custom_call.1} parent=11 // pred_fallthru
          _
        // Predicated region
        $region17: #{tpu_custom_call.1} parent=11 // pred_check
          %p189 = pneg %p113
        $region18: #{tpu_custom_call.1} parent=11 // pred_check_branch
          %191 = sbr.rel (%p189) target = $region20
        $region19: #{tpu_custom_call.1} parent=11 // pred_region
          %p192 = scmp.lt.s32.totalorder %s24, 0
          %s193 = scalar_select %p192, %s24, 0
          %s194 = smul.addr %s193, 8
          %s195 = scalar_lea.vmem %s2, %s194
        $region20: #{tpu_custom_call.1} parent=11 // pred_fallthru
          _
        // Predicated region
        $region21: #{tpu_custom_call.1} parent=11 // pred_check
          %p196 = pneg %p139
        $region22: #{tpu_custom_call.1} parent=11 // pred_check_branch
          %198 = sbr.rel (%p196) target = $region24
        $region23: #{tpu_custom_call.1} parent=11 // pred_region
          %p199 = scmp.lt.s32.totalorder %s25, 0
          %s200 = scalar_select %p199, %s25, 0
          %s201 = smul.addr %s200, 4
          %s202 = scalar_lea.vmem %s3, %s201
        $region24: #{tpu_custom_call.1} parent=11 // pred_fallthru
          _
      $region12: #{tpu_custom_call.1} parent=5 // pred_fallthru
        _
      %p203 = scmp.lt.s32.totalorder %s14, 4
      // Predicated region
      $region25: #{tpu_custom_call.1} parent=5 // pred_check
        %p204 = pneg %p203
      $region26: #{tpu_custom_call.1} parent=5 // pred_check_branch
        %206 = sbr.rel (%p204) target = $region28
      $region27: #{tpu_custom_call.1} parent=5 // pred_region
        // Predicated region
        $region29: #{tpu_custom_call.1} parent=27 // pred_check
          %p207 = pneg %p81
        $region30: #{tpu_custom_call.1} parent=27 // pred_check_branch
          %209 = sbr.rel (%p207) target = $region32
        $region31: #{tpu_custom_call.1} parent=27 // pred_region
          %s210 = sand.u32 %s71, 1
          %s211 = scalar_lea.sflag [#allocation4], %s210
          %s212 = sand.u32 %s71, 1
          %s213 = smul.addr %s212, 128
          %s214 = scalar_lea.vmem [#allocation3], %s213
          %s215 = smul.u32 16, %s23
          %217 = vsyncadd %s211, 0
          %s218 = sadd.s32 %s22, %s215
          %s219 = smul.addr %s218, 8
          %s220 = scalar_lea.hbm %s1, %s219
          %s221 = sshll.u32 %s220, 4
          %s222 = int_to_ptr.hbm [resolvable:$true] %s221
          %s223 = sshll.u32 %s214, 4
          %s224 = int_to_ptr.vmem [resolvable:$true] %s223
          %229 = dma.hbm_to_vmem [thread:$0]  %s222, 2048, %s224, %s211, 128, 128, 8
        $region32: #{tpu_custom_call.1} parent=27 // pred_fallthru
          _
      $region28: #{tpu_custom_call.1} parent=5 // pred_fallthru
        _
      %p230 = scmp.le.s32.totalorder 1, %s14
      %p231 = scmp.lt.s32.totalorder %s14, 5
      %p232 = pnand %p230, %p231
      %p233 = pneg %p232
      // Predicated region
      $region33: #{tpu_custom_call.1} parent=5 // pred_check
        _
      $region34: #{tpu_custom_call.1} parent=5 // pred_check_branch
        %235 = sbr.rel (%p232) target = $region36
      $region35: #{tpu_custom_call.1} parent=5 // pred_region
        %s236 = ssub.s32 %s14, 1
        %s237 = sand.u32 %s74, 1
        %s238 = scalar_lea.sflag [#allocation4], %s237
        %s239 = sand.u32 %s74, 1
        %s240 = smul.addr %s239, 128
        %s241 = scalar_lea.vmem [#allocation3], %s240
        // Predicated region
        $region37: #{tpu_custom_call.1} parent=35 // pred_check
          %p242 = pneg %p87
        $region38: #{tpu_custom_call.1} parent=35 // pred_check_branch
          %244 = sbr.rel (%p242) target = $region40
        $region39: #{tpu_custom_call.1} parent=35 // pred_region
          %246 = dma.done %s238, 2048
        $region40: #{tpu_custom_call.1} parent=35 // pred_fallthru
          _
        %p247 = scmp.lt.s32.totalorder %s24, 0
        %s248 = scalar_select %p247, %s24, 0
        %s249 = smul.addr %s248, 8
        %s250 = scalar_lea.vmem %s0, %s249
        %p251 = pneg %p59
        %p252 = pneg %p56
        %s253 = sand.u32 %s74, 1
        %s254 = scalar_lea.sflag [#allocation4], %s253
        %s255 = sand.u32 %s74, 1
        %s256 = smul.addr %s255, 128
        %s257 = scalar_lea.vmem [#allocation3], %s256
        %p258 = pneg %p87
        %p259 = pneg %p84
        %p260 = scmp.lt.s32.totalorder %s24, 0
        %s261 = scalar_select %p260, %s24, 0
        %s262 = smul.addr %s261, 8
        %s263 = scalar_lea.vmem %s2, %s262
        %p264 = pneg %p113
        %p265 = pneg %p110
        %p266 = scmp.lt.s32.totalorder %s25, 0
        %s267 = scalar_select %p266, %s25, 0
        %s268 = smul.addr %s267, 4
        %s269 = scalar_lea.vmem %s3, %s268
        %p270 = pneg %p139
        %p271 = pneg %p136
        %p272 = pneg %p167
        %p273 = pneg %p164
        %p274 = scmp.lt.s32.totalorder %s24, 0
        %s275 = scalar_select %p274, %s24, 0
        %s276 = smul.addr %s275, 8
        %s277 = scalar_lea.vmem %s0, %s276
        %s278 = smul.u32 16, %s26
        %p279 = scmp.lt.s32.totalorder %s24, 0
        %s280 = scalar_select %p279, %s24, 0
        %s281 = smul.addr %s280, 8
        %s282 = scalar_lea.vmem %s2, %s281
        %p283 = scmp.lt.s32.totalorder %s25, 0
        %s284 = scalar_select %p283, %s25, 0
        %s285 = smul.addr %s284, 4
        %s286 = scalar_lea.vmem %s3, %s285
        %p287 = scmp.eq.s32.totalorder %s26, 0
        // Predicated region
        $region41: #{tpu_custom_call.1} parent=35 // pred_check
          %p288 = pneg %p287
        $region42: #{tpu_custom_call.1} parent=35 // pred_check_branch
          %290 = sbr.rel (%p288) target = $region44
        $region43: #{tpu_custom_call.1} parent=35 // pred_region
          %v291 = vld [vmem:[%s282] sm:$0xff]
          %v292 = vld [vmem:[%s286] sm:$0xf]
          %294 = vset.pattern.permute.xlu0 0
          %295 = vperm.xlu0 %294, %v291
          %v296 = vpop.permute.xlu0 %295
          %v298 = vperm.slane %v292, 0
          %v299 = vmul.f32 %v296, %v298
          %300 = vset.pattern.permute.xlu0 1
          %301 = vperm.xlu0 %300, %v291
          %v302 = vpop.permute.xlu0 %301
          %v304 = vperm.slane %v292, 1
          %v305 = vmul.f32 %v302, %v304
          %v306 = vadd.f32 %v299, %v305
          %307 = vset.pattern.permute.xlu0 2
          %308 = vperm.xlu0 %307, %v291
          %v309 = vpop.permute.xlu0 %308
          %v311 = vperm.slane %v292, 2
          %v312 = vmul.f32 %v309, %v311
          %v313 = vadd.f32 %v306, %v312
          %314 = vset.pattern.permute.xlu0 3
          %315 = vperm.xlu0 %314, %v291
          %v316 = vpop.permute.xlu0 %315
          %v318 = vperm.slane %v292, 3
          %v319 = vmul.f32 %v316, %v318
          %v320 = vadd.f32 %v313, %v319
          %321 = vst [vmem:[#allocation2] sm:$0xff] %v320
        $region44: #{tpu_custom_call.1} parent=35 // pred_fallthru
          _
        %v322 = vld [vmem:[%s282] sm:$0xff]
        %v323 = vlaneseq
        %v324 = vand.u32 %v323, 127
        %v325 = vstv %s26
        %vm326 = vcmp.eq.s32.totalorder %v324, %v325
        %v327 = vsel %vm326, %v322, 0.0
        %vm328 = vcmask 31744
        %v329 = vsel %vm328, %v327, 0.0
        %330 = vadd.xlane.f32.xlu0 %v329
        %v331 = vpop.xlane.xlu0 %330
        %v332 = vld [vmem:[%s277] sm:$0xff]
        %v333 = vld [vmem:[%s241] sm:$0xff]
        %v334 = vld [vmem:[%s241 + $0x8] sm:$0xff]
        %v335 = vld [vmem:[%s241 + $0x10] sm:$0xff]
        %v336 = vld [vmem:[%s241 + $0x18] sm:$0xff]
        %v337 = vld [vmem:[%s241 + $0x20] sm:$0xff]
        %v338 = vld [vmem:[%s241 + $0x28] sm:$0xff]
        %v339 = vld [vmem:[%s241 + $0x30] sm:$0xff]
        %v340 = vld [vmem:[%s241 + $0x38] sm:$0xff]
        %v341 = vld [vmem:[%s241 + $0x40] sm:$0xff]
        %v342 = vld [vmem:[%s241 + $0x48] sm:$0xff]
        %v343 = vld [vmem:[%s241 + $0x50] sm:$0xff]
        %v344 = vld [vmem:[%s241 + $0x58] sm:$0xff]
        %v345 = vld [vmem:[%s241 + $0x60] sm:$0xff]
        %v346 = vld [vmem:[%s241 + $0x68] sm:$0xff]
        %v347 = vld [vmem:[%s241 + $0x70] sm:$0xff]
        %v348 = vld [vmem:[%s241 + $0x78] sm:$0xff]
        %349 = vmatpush.msra.mxu0 %v348
        %350 = vmatpush.msra.mxu0 %v347
        %351 = vmatpush.msra.mxu0 %v346
        %352 = vmatpush.msra.mxu0 %v345
        %353 = vmatpush.msra.mxu0 %v344
        %354 = vmatpush.msra.mxu0 %v343
        %355 = vmatpush.msra.mxu0 %v342
        %356 = vmatpush.msra.mxu0 %v341
        %357 = vmatpush.msra.mxu0 %v340
        %358 = vmatpush.msra.mxu0 %v339
        %359 = vmatpush.msra.mxu0 %v338
        %360 = vmatpush.msra.mxu0 %v337
        %361 = vmatpush.msra.mxu0 %v336
        %362 = vmatpush.msra.mxu0 %v335
        %363 = vmatpush.msra.mxu0 %v334
        %364 = vmatpush.msra.mxu0 %v333
        %365 = vmatmul.f32.gmra.mxu0 %v332
        %v366 = vpop.f32.mrf.mxu0
        %v367 = vadd.f32 0.0, %v366
        %368 = vdwg.mxu0
        %v369 = vld [vmem:[#allocation2] sm:$0xff]
        %v370 = vmul.f32 %v331, %v367
        %v371 = vadd.f32 %v369, %v370
        %372 = vst [vmem:[#allocation2] sm:$0xff] %v371
        %p373 = scmp.eq.s32.totalorder %s26, 3
        // Predicated region
        $region45: #{tpu_custom_call.1} parent=35 // pred_check
          %p374 = pneg %p373
        $region46: #{tpu_custom_call.1} parent=35 // pred_check_branch
          %376 = sbr.rel (%p374) target = $region48
        $region47: #{tpu_custom_call.1} parent=35 // pred_region
          %v377 = vld [vmem:[#allocation2] sm:$0xff]
          %v378 = vmax.f32 %v377, 0.0
          %379 = vst [vmem:[#allocation6] sm:$0xff] %v378
        $region48: #{tpu_custom_call.1} parent=35 // pred_fallthru
          _
        // Predicated region
        $region49: #{tpu_custom_call.1} parent=35 // pred_check
          %p380 = pneg %p164
        $region50: #{tpu_custom_call.1} parent=35 // pred_check_branch
          %382 = sbr.rel (%p380) target = $region52
        $region51: #{tpu_custom_call.1} parent=35 // pred_region
          %384 = vsyncadd [#allocation5], 0
          %s385 = sadd.s32 %s25, %s24
          %s386 = smul.addr %s385, 8
          %s387 = scalar_lea.hbm %s4, %s386
          %s389 = sshll.u32 [#allocation6], 4
          %s390 = int_to_ptr.vmem [resolvable:$true] %s389
          %s391 = sshll.u32 %s387, 4
          %s392 = int_to_ptr.hbm [resolvable:$true] %s391
          %394 = dma.vmem_to_hbm [thread:$0]  %s390, 128, %s392, [#allocation5]
        $region52: #{tpu_custom_call.1} parent=35 // pred_fallthru
          _
        // Predicated region
        $region53: #{tpu_custom_call.1} parent=35 // pred_check
          %p395 = pneg %p164
        $region54: #{tpu_custom_call.1} parent=35 // pred_check_branch
          %397 = sbr.rel (%p395) target = $region56
        $region55: #{tpu_custom_call.1} parent=35 // pred_region
          %399 = dma.done [#allocation5], 128
        $region56: #{tpu_custom_call.1} parent=35 // pred_fallthru
          _
      $region36: #{tpu_custom_call.1} parent=5 // pred_fallthru
        _
      %p400 = scmp.le.s32.totalorder 2, %s14
      // Predicated region
      $region57: #{tpu_custom_call.1} parent=5 // pred_check
        %p401 = pneg %p400
      $region58: #{tpu_custom_call.1} parent=5 // pred_check_branch
        %403 = sbr.rel (%p401) target = $region60
      $region59: #{tpu_custom_call.1} parent=5 // pred_region
        %s404 = ssub.s32 %s14, 2
      $region60: #{tpu_custom_call.1} parent=5 // pred_fallthru
        _
    $region6: #{tpu_custom_call.1} parent=1 // loop_footer
      %s18 = sadd.s32 1, %s14
    $region7: #{tpu_custom_call.1} parent=1 // loop_footer_branch
      %13 = sbr.rel target = $region3
    $region8: #{tpu_custom_call.1} parent=1 // loop_exit
      _
    %405 = vsyncpa [#allocation4], 1
    %s406 = scalar_lea.sflag [#allocation4], 1
    %407 = vsyncpa %s406, 1
    %408 = vsyncpa [#allocation5], 1
    %s409 = scalar_lea.sflag [#allocation5], 1
    %410 = vsyncpa %s409, 1

</llo_original>
